<compile_context>
chip_gen: v5e
topology: v5e:2x2
jax: 0.10.0
libtpu: 0.0.40
codegen_flags: <defaults>
</compile_context>

<pallas_src>
import jax
import jax.numpy as jnp
from jax.experimental import pallas as pl
from jax.experimental.pallas import tpu as pltpu

OUT_DIM = 10            # nn.Linear(indim, 10)
LANE = 128              # lane-dense padded logits width (compute only)
_NEG_PAD = -1e30        # large finite negative for padded bias columns
MIN_TILE_BATCH = 256    # multiple of 8; floor for megacore splitting
_X_TILE_BYTES = 4 << 20 # ~4 MiB per x tile (x is double-buffered -> ~8 MiB)
_SMALL_PROBLEM_ELEMS = 1 << 17  # below this, fused XLA beats pallas_call cost


def output_decoder_kernel(x_ref, w_ref, b_ref, o_ref):
    # x_ref: [tb, indim], w_ref: [indim, 128], b_ref: [1, 128], o_ref: [tb, 10]
    logits = jnp.dot(
        x_ref[...], w_ref[...], preferred_element_type=jnp.float32
    ) + b_ref[...]                                   # f32 [tb, 128]
    m = jnp.max(logits, axis=-1, keepdims=True)      # pad cols (-1e30) never win
    shifted = logits - m
    lse = jnp.log(jnp.sum(jnp.exp(shifted), axis=-1, keepdims=True))
    # Store only the 10 real columns (masked vst; output HBM traffic = B*10*4).
    o_ref[...] = (shifted[:, :OUT_DIM] - lse).astype(o_ref.dtype)


def prepare_params(weight, bias):
    """One-time param prep (hoisted out of the forward path).

    weight: [10, indim] (PyTorch layout), bias: [10]
    returns: w_pad [indim, 128] (zero-padded), b_pad [1, 128] f32 (-1e30 pad)
    """
    out_dim, indim = weight.shape
    w_pad = jnp.zeros((indim, LANE), weight.dtype).at[:, :out_dim].set(weight.T)
    b_pad = (
        jnp.full((1, LANE), _NEG_PAD, dtype=jnp.float32)
        .at[0, :out_dim]
        .set(bias.astype(jnp.float32))
    )
    return w_pad, b_pad


def _round_up(n, m):
    return -(-n // m) * m


def _choose_tile_batch(B, indim, x_itemsize):
    """Batch tile: ~4 MiB of x per tile, multiple of 8, >=2 steps for megacore."""
    row_bytes = max(indim * x_itemsize, 1)
    cap = max(8, (_X_TILE_BYTES // row_bytes) // 8 * 8)
    tb = min(_round_up(B, 8), cap)
    if B >= 2 * MIN_TILE_BATCH:
        # Guarantee at least 2 grid steps so v7x's second TensorCore gets work
        # (no-op on v5e/v6e, which have a single TC).
        tb = min(tb, max(MIN_TILE_BATCH, _round_up(pl.cdiv(B, 2), 8)))
    return max(8, tb)


def _vmem_limit_bytes(tb, indim, x_itemsize, out_itemsize, w_itemsize):
    """Explicit scoped-VMEM budget for the in-flight buffers (+ headroom)."""
    x_buf = 2 * tb * indim * x_itemsize            # double-buffered x tiles
    o_buf = 2 * tb * LANE * max(out_itemsize, 4)   # out tiles (lane-padded in VMEM)
    w_buf = 2 * indim * LANE * w_itemsize          # resident weight, counted 2x
    b_buf = 2 * 8 * LANE * 4                       # resident bias (sublane-padded)
    logits = tb * LANE * 4                         # f32 logits intermediate
    need = x_buf + o_buf + w_buf + b_buf + logits
    limit = max(need + (8 << 20), 16 << 20)        # headroom for compiler temps
    return int(min(limit, 64 << 20))               # never exceed v7x physical VMEM


def output_decoder_prepared(x, w_pad, b_pad, *, prefer_pallas=None, tile_batch=None):
    """x: [B, indim]; w_pad: [indim, 128]; b_pad: [1, 128] -> [B, 10]."""
    B, indim = x.shape

    if prefer_pallas is None:
        prefer_pallas = B * indim >= _SMALL_PROBLEM_ELEMS
    if not prefer_pallas:
        # Tiny problems: plain fused XLA path beats pallas_call fixed cost.
        logits = (x @ w_pad[:, :OUT_DIM]).astype(jnp.float32) + b_pad[0, :OUT_DIM]
        return jax.nn.log_softmax(logits, axis=-1).astype(x.dtype)

    tb = tile_batch if tile_batch is not None else _choose_tile_batch(
        B, indim, x.dtype.itemsize)
    grid = (pl.cdiv(B, tb),)

    cost = pl.CostEstimate(
        flops=2 * B * indim * LANE,                 # padded matmul actually runs
        transcendentals=B * (LANE + 1),             # 128 exp lanes + 1 log per row
        bytes_accessed=(B * indim * x.dtype.itemsize
                        + B * OUT_DIM * x.dtype.itemsize
                        + indim * LANE * w_pad.dtype.itemsize
                        + LANE * 4),
    )

    out = pl.pallas_call(
        output_decoder_kernel,
        out_shape=jax.ShapeDtypeStruct((B, OUT_DIM), x.dtype),
        grid=grid,
        in_specs=[
            pl.BlockSpec((tb, indim), lambda i: (i, 0)),       # x: tiled over batch
            pl.BlockSpec((indim, LANE), lambda i: (0, 0)),     # weight: resident
            pl.BlockSpec((1, LANE), lambda i: (0, 0)),         # bias: resident
        ],
        # Last block dim equals the full array dim (10), so this is legal even
        # though 10 % 128 != 0; stores are masked but output HBM traffic is 12.8x
        # smaller than the padded alternative and no post-kernel slice is needed.
        out_specs=pl.BlockSpec((tb, OUT_DIM), lambda i: (i, 0)),
        compiler_params=pltpu.CompilerParams(
            dimension_semantics=("parallel",),                 # megacore on v7x
            vmem_limit_bytes=_vmem_limit_bytes(
                tb, indim, x.dtype.itemsize, x.dtype.itemsize,
                w_pad.dtype.itemsize),
        ),
        cost_estimate=cost,
    )(x, w_pad, b_pad)

    return out


def output_decoder(x, weight, bias, **kwargs):
    """Convenience wrapper taking PyTorch-layout params."""
    w_pad, b_pad = prepare_params(weight, bias)
    return output_decoder_prepared(x, w_pad, b_pad, **kwargs)


def reference(x, weight, bias):
    logits = x @ weight.T + bias
    return jax.nn.log_softmax(logits, axis=-1)


if __name__ == "__main__":
    key = jax.random.PRNGKey(0)
    k_x, k_w, k_b, k_x2 = jax.random.split(key, 4)

    batch, indim = 8, 32

    # Deterministic init mimicking nn.Linear's uniform(-1/sqrt(indim), ...).
    bound = 1.0 / (indim ** 0.5)
    weight = jax.random.uniform(k_w, (OUT_DIM, indim), jnp.float32, -bound, bound)
    bias = jax.random.uniform(k_b, (OUT_DIM,), jnp.float32, -bound, bound)
    x = jax.random.normal(k_x, (batch, indim), jnp.float32)

    # Hoist param prep (done once at "init time").
    w_pad, b_pad = prepare_params(weight, bias)

    # Force the Pallas path so the kernel is exercised even at demo scale
    # (the size-based dispatch would otherwise route this to plain XLA).
    out = output_decoder_prepared(x, w_pad, b_pad, prefer_pallas=True)
    out = jax.block_until_ready(out)
    ref = reference(x, weight, bias)
    assert out.shape == (batch, OUT_DIM)
    assert jnp.allclose(out, ref, atol=1e-5, rtol=1e-5)

    # Multi-tile + ragged last tile check: 20 rows, tile_batch=8 -> grid=(3,);
    # the last tile reads 4 garbage rows whose outputs are masked away.
    batch2 = 20
    x2 = jax.random.normal(k_x2, (batch2, indim), jnp.float32)
    out2 = jax.block_until_ready(
        output_decoder_prepared(x2, w_pad, b_pad, prefer_pallas=True, tile_batch=8))
    ref2 = reference(x2, weight, bias)
    assert out2.shape == (batch2, OUT_DIM)
    assert jnp.allclose(out2, ref2, atol=1e-5, rtol=1e-5)

    # Size-based dispatch (small -> XLA fallback) must match too.
    out3 = jax.block_until_ready(output_decoder(x, weight, bias))
    assert jnp.allclose(out3, ref, atol=1e-5, rtol=1e-5)

    print("KERNEL_OK")
</pallas_src>

<mosaic_0001>
module attributes {stable_mosaic.version = 11 : i64} {
  func.func @output_decoder_kernel(%arg0: i32, %arg1: memref<8x32xf32, #tpu.memory_space<vmem>>, %arg2: memref<32x128xf32, #tpu.memory_space<vmem>>, %arg3: memref<1x128xf32, #tpu.memory_space<vmem>>, %arg4: memref<8x10xf32, #tpu.memory_space<vmem>>) attributes {dimension_semantics = [#tpu.dimension_semantics<parallel>], iteration_bounds = array<i64: 1>, scalar_prefetch = 0 : i64, scratch_operands = 0 : i64, tpu.core_type = #tpu.core_type<tc>, window_params = [{transform_indices = @transform_0, window_bounds = array<i64: 8, 32>}, {pipeline_mode = #tpu.pipeline_mode<synchronous>, transform_indices = @transform_1, window_bounds = array<i64: 32, 128>}, {pipeline_mode = #tpu.pipeline_mode<synchronous>, transform_indices = @transform_2, window_bounds = array<i64: 1, 128>}, {transform_indices = @transform_3, window_bounds = array<i64: 8, 10>}]} {
    %c0 = arith.constant 0 : index
    %c0_0 = arith.constant 0 : index
    %0 = vector.load %arg1[%c0, %c0_0] : memref<8x32xf32, #tpu.memory_space<vmem>>, vector<8x32xf32>
    %c0_1 = arith.constant 0 : index
    %c0_2 = arith.constant 0 : index
    %1 = vector.load %arg2[%c0_1, %c0_2] : memref<32x128xf32, #tpu.memory_space<vmem>>, vector<32x128xf32>
    %cst = arith.constant dense<0.000000e+00> : vector<8x128xf32>
    %2 = tpu.matmul %0, %1, %cst {dimension_numbers = #tpu.dot_dimension_numbers<[1], [0], [0], [1], [0, 0, 1, 1], [], []>} : vector<8x32xf32>, vector<32x128xf32>, vector<8x128xf32> -> vector<8x128xf32>
    %c0_3 = arith.constant 0 : index
    %c0_4 = arith.constant 0 : index
    %3 = vector.load %arg3[%c0_3, %c0_4] : memref<1x128xf32, #tpu.memory_space<vmem>>, vector<1x128xf32>
    %4 = vector.broadcast %3 : vector<1x128xf32> to vector<8x128xf32>
    %5 = arith.addf %2, %4 : vector<8x128xf32>
    %cst_5 = arith.constant dense<0xFF800000> : vector<8xf32>
    %6 = vector.multi_reduction <maximumf>, %5, %cst_5 [1] : vector<8x128xf32> to vector<8xf32>
    %7 = vector.shape_cast %6 : vector<8xf32> to vector<8x1xf32>
    %8 = vector.broadcast %7 : vector<8x1xf32> to vector<8x128xf32>
    %9 = arith.subf %5, %8 : vector<8x128xf32>
    %10 = math.exp %9 : vector<8x128xf32>
    %cst_6 = arith.constant dense<0.000000e+00> : vector<8xf32>
    %11 = vector.multi_reduction <add>, %10, %cst_6 [1] : vector<8x128xf32> to vector<8xf32>
    %12 = vector.shape_cast %11 : vector<8xf32> to vector<8x1xf32>
    %13 = math.log %12 : vector<8x1xf32>
    %14 = vector.extract_strided_slice %9 {offsets = [0, 0], sizes = [8, 10], strides = [1, 1]} : vector<8x128xf32> to vector<8x10xf32>
    %15 = vector.broadcast %13 : vector<8x1xf32> to vector<8x10xf32>
    %16 = arith.subf %14, %15 : vector<8x10xf32>
    %c0_7 = arith.constant 0 : index
    %c0_8 = arith.constant 0 : index
    %17 = vector.load %arg4[%c0_7, %c0_8] : memref<8x10xf32, #tpu.memory_space<vmem>>, vector<8x10xf32>
    tpu.vector_store %arg4[%c0_7, %c0_8], %16 {strides = array<i32>} : memref<8x10xf32, #tpu.memory_space<vmem>>, vector<8x10xf32>,
    return
  }
  func.func @transform_0(%arg0: i32) -> (i32, i32) {
    %c0_i32 = arith.constant 0 : i32
    %c0_i32_0 = arith.constant 0 : i32
    return %arg0, %c0_i32 : i32, i32
  }
  func.func @transform_1(%arg0: i32) -> (i32, i32) {
    %c0_i32 = arith.constant 0 : i32
    %c0_i32_0 = arith.constant 0 : i32
    %c0_i32_1 = arith.constant 0 : i32
    return %c0_i32, %c0_i32_0 : i32, i32
  }
  func.func @transform_2(%arg0: i32) -> (i32, i32) {
    %c0_i32 = arith.constant 0 : i32
    %c0_i32_0 = arith.constant 0 : i32
    %c0_i32_1 = arith.constant 0 : i32
    return %c0_i32, %c0_i32_0 : i32, i32
  }
  func.func @transform_3(%arg0: i32) -> (i32, i32) {
    %c0_i32 = arith.constant 0 : i32
    %c0_i32_0 = arith.constant 0 : i32
    return %arg0, %c0_i32 : i32, i32
  }
}

</mosaic_0001>

<llo_original>
// kernel: tpu_custom_call.1
$region0: #{tpu_custom_call.1}
  #allocation0 [shape = 'u32[]', space=smem, size = 0x4, offset = 0x4, fixed_abs, tag = 'smem constant byte address 0x4 - core index']
  #allocation1 [shape = 'u32[72,128]{1,0:T(1,128)}', space=vmem, size = 0x9000, scoped, tag = 'internal scratch']
  %s0 = inlined_call_operand.hbm [shape: f32[8,32], index: 0, kind: input, shape index: {}]
  %s1 = inlined_call_operand.hbm [shape: f32[32,128], index: 1, kind: input, shape index: {}]
  %s2 = inlined_call_operand.vmem [shape: f32[1,128], index: 2, kind: input, shape index: {}]
  %s3 = inlined_call_operand.hbm [shape: f32[8,10], index: 3, kind: output, shape index: {}]
  %s4 = sld [smem:[#allocation0]]
  $region30: #{tpu_custom_call.1} parent=0
    _
  %s6 = ssub.s32 1, %s4
  %s7 = scalar_select 0, %s6, %s4
  $region1: #{tpu_custom_call.1} parent=0
    #allocation2 [shape = 'u8[4096]{0}', space=vmem, size = 0x1000, scoped, tag = 'input window, operand 0, single buffered']
    #allocation3 [shape = 's32[1]{0}', space=sflag, size = 0x4, scoped, tag = 'scoped memory for tpu_custom_call.1']
    #allocation4 [shape = 's32[1]{0}', space=sflag, size = 0x4, scoped, tag = 'scoped memory for tpu_custom_call.1']
    #allocation5 [shape = 'u8[16384]{0}', space=vmem, size = 0x4000, scoped, tag = 'input window, operand 1, single buffered']
    #allocation6 [shape = 's32[1]{0}', space=sflag, size = 0x4, scoped, tag = 'scoped memory for tpu_custom_call.1']
    #allocation7 [shape = 'u8[4096]{0}', space=vmem, size = 0x1000, scoped, tag = 'output window, operand 0, single buffered']
    %8 = vsyncpa [#allocation3], 0
    %9 = vsyncpa [#allocation6], 0
    %10 = vsyncpa [#allocation4], 0
    // Predicated region
    $region2: #{tpu_custom_call.1} parent=1 // pred_check
      _
    $region3: #{tpu_custom_call.1} parent=1 // pred_check_branch
      %12 = sbr.rel (0) target = $region5
    $region4: #{tpu_custom_call.1} parent=1 // pred_region
      %14 = vsyncadd [#allocation3], 0
      %s16 = sshll.u32 %s0, 4
      %s17 = int_to_ptr.hbm [resolvable:$true] %s16
      %s18 = sshll.u32 [#allocation2], 4
      %s19 = int_to_ptr.vmem [resolvable:$true] %s18
      %21 = dma.hbm_to_vmem [thread:$0]  %s17, 128, %s19, [#allocation3]
    $region5: #{tpu_custom_call.1} parent=1 // pred_fallthru
      _
    // Predicated region
    $region6: #{tpu_custom_call.1} parent=1 // pred_check
      _
    $region7: #{tpu_custom_call.1} parent=1 // pred_check_branch
      %23 = sbr.rel (0) target = $region9
    $region8: #{tpu_custom_call.1} parent=1 // pred_region
      %25 = vsyncadd [#allocation6], 0
      %s26 = sshll.u32 %s1, 4
      %s27 = int_to_ptr.hbm [resolvable:$true] %s26
      %s28 = sshll.u32 [#allocation5], 4
      %s29 = int_to_ptr.vmem [resolvable:$true] %s28
      %34 = dma.hbm_to_vmem [thread:$0]  %s27, 512, %s29, [#allocation6], 128, 128, 8
    $region9: #{tpu_custom_call.1} parent=1 // pred_fallthru
      _
    // Predicated region
    $region10: #{tpu_custom_call.1} parent=1 // pred_check
      _
    $region11: #{tpu_custom_call.1} parent=1 // pred_check_branch
      %36 = sbr.rel (0) target = $region13
    $region12: #{tpu_custom_call.1} parent=1 // pred_region
      _
    $region13: #{tpu_custom_call.1} parent=1 // pred_fallthru
      _
    // Predicated region
    $region14: #{tpu_custom_call.1} parent=1 // pred_check
      _
    $region15: #{tpu_custom_call.1} parent=1 // pred_check_branch
      %38 = sbr.rel (0) target = $region17
    $region16: #{tpu_custom_call.1} parent=1 // pred_region
      %40 = dma.done [#allocation3], 128
    $region17: #{tpu_custom_call.1} parent=1 // pred_fallthru
      _
    // Predicated region
    $region18: #{tpu_custom_call.1} parent=1 // pred_check
      _
    $region19: #{tpu_custom_call.1} parent=1 // pred_check_branch
      %42 = sbr.rel (0) target = $region21
    $region20: #{tpu_custom_call.1} parent=1 // pred_region
      %44 = dma.done [#allocation6], 512
    $region21: #{tpu_custom_call.1} parent=1 // pred_fallthru
      _
    %v45 = vld [vmem:[#allocation2] sm:$0xff]
    %v46 = vld [vmem:[#allocation5] sm:$0xff]
    %v47 = vld [vmem:[#allocation5 + $0x8] sm:$0xff]
    %v48 = vld [vmem:[#allocation5 + $0x10] sm:$0xff]
    %v49 = vld [vmem:[#allocation5 + $0x18] sm:$0xff]
    %v50 = vld [vmem:[%s2] sm:$0x1]
    %v52 = vperm.slane %v50, 0
    %vm54 = vcmask 261120
    %v56 = vsel %vm54, %v45, 0
    %58 = vmatpush.msra.mxu0 0.0
    %59 = vmatpush.msra.mxu0 0.0
    %60 = vmatpush.msra.mxu0 0.0
    %61 = vmatpush.msra.mxu0 0.0
    %62 = vmatpush.msra.mxu0 0.0
    %63 = vmatpush.msra.mxu0 0.0
    %64 = vmatpush.msra.mxu0 0.0
    %65 = vmatpush.msra.mxu0 0.0
    %66 = vmatpush.msra.mxu0 0.0
    %67 = vmatpush.msra.mxu0 0.0
    %68 = vmatpush.msra.mxu0 0.0
    %69 = vmatpush.msra.mxu0 0.0
    %70 = vmatpush.msra.mxu0 %v49
    %71 = vmatpush.msra.mxu0 %v48
    %72 = vmatpush.msra.mxu0 %v47
    %73 = vmatpush.msra.mxu0 %v46
    %74 = vmatmul.f32.gmra.mxu0 %v56
    %v75 = vpop.f32.mrf.mxu0
    %v76 = vadd.f32 %v52, %v75
    %77 = vdwg.mxu0
    %78 = vmax.xlane.f32.xlu0 %v76
    %v79 = vpop.xlane.xlu0 %78
    %v80 = vsub.f32 %v76, %v79
    %v81 = vmul.f32 %v80, 1.442695
    %v82 = vpow.pop %v81
    %83 = vadd.xlane.f32.xlu0 %v82
    %v84 = vpop.xlane.xlu0 %83
    %v85 = vlog2.pop %v84
    %v86 = vmul.f32 %v85, 0.6931472
    %v87 = vsub.f32 %v80, %v86
    %vm88 = vcmask 80896
    %89 = vst.msk [vmem:[#allocation7] sm:$0xff] %vm88, %v87
    // Predicated region
    $region22: #{tpu_custom_call.1} parent=1 // pred_check
      _
    $region23: #{tpu_custom_call.1} parent=1 // pred_check_branch
      %91 = sbr.rel (0) target = $region25
    $region24: #{tpu_custom_call.1} parent=1 // pred_region
      %93 = vsyncadd [#allocation4], 0
      %s95 = sshll.u32 [#allocation7], 4
      %s96 = int_to_ptr.vmem [resolvable:$true] %s95
      %s97 = sshll.u32 %s3, 4
      %s98 = int_to_ptr.hbm [resolvable:$true] %s97
      %100 = dma.vmem_to_hbm [thread:$0]  %s96, 128, %s98, [#allocation4]
    $region25: #{tpu_custom_call.1} parent=1 // pred_fallthru
      _
    // Predicated region
    $region26: #{tpu_custom_call.1} parent=1 // pred_check
      _
    $region27: #{tpu_custom_call.1} parent=1 // pred_check_branch
      %102 = sbr.rel (0) target = $region29
    $region28: #{tpu_custom_call.1} parent=1 // pred_region
      %104 = dma.done [#allocation4], 128
    $region29: #{tpu_custom_call.1} parent=1 // pred_fallthru
      _
    %105 = vsyncpa [#allocation3], 1
    %106 = vsyncpa [#allocation6], 1
    %107 = vsyncpa [#allocation4], 1

</llo_original>
